<compile_context>
chip_gen: v7x
topology: tpu7x:2x2x1
jax: 0.10.0
libtpu: 0.0.40
codegen_flags: <defaults>
</compile_context>

<pallas_src>
import math
import jax
import jax.numpy as jnp
from jax import lax
from jax.experimental import pallas as pl
from jax.experimental.pallas import tpu as pltpu

SEQ = 8
DIM = 8
INV_SCALE = 1.0 / math.sqrt(8.0)   # module does z1.div(inv_scale) == multiply by sqrt(8)
DROPOUT_P = 0.3


def attn_kernel(x_ref, w_ref, b_ref, drop_ref, o_ref):
    x = x_ref[...]                                                   # (SEQ, DIM) f32

    # Fused Q/K/V projection: x @ Wqkv_t + b   (Wqkv_t is (DIM, 3*DIM), pre-transposed;
    # the Q columns are already pre-scaled by sqrt(8) == 1/INV_SCALE).
    qkv = jnp.dot(x, w_ref[...], preferred_element_type=jnp.float32) + b_ref[...]
    q = qkv[:, 0:DIM]
    k = qkv[:, DIM:2 * DIM]
    v = qkv[:, 2 * DIM:3 * DIM]

    # z2 = (q @ k^T) * sqrt(8)  -- scale already folded into q; contract feature
    # axes directly so no explicit transpose of k is materialized.
    z = lax.dot_general(q, k, (((1,), (1,)), ((), ())),
                        preferred_element_type=jnp.float32)          # (SEQ, SEQ)

    # softmax over last dim (numerically stable)
    z = z - jnp.max(z, axis=-1, keepdims=True)
    e = jnp.exp(z)
    p = e * pl.reciprocal(jnp.sum(e, axis=-1, keepdims=True), approx=True)

    # dropout: drop_ref holds 0 or 1/(1-p) (inverted-scaling already folded in)
    pd = p * drop_ref[...]

    # z5 = dropped_probs @ V
    o_ref[...] = jnp.dot(pd, v, preferred_element_type=jnp.float32)


def model_forward(x, packed_w, packed_b, drop_scale):
    vmem = pl.BlockSpec(memory_space=pltpu.MemorySpace.VMEM)
    return pl.pallas_call(
        attn_kernel,
        out_shape=jax.ShapeDtypeStruct((SEQ, DIM), jnp.float32),
        in_specs=[vmem, vmem, vmem, vmem],
        out_specs=vmem,
        cost_estimate=pl.CostEstimate(
            flops=2 * SEQ * DIM * 3 * DIM + 2 * SEQ * SEQ * DIM + 2 * SEQ * SEQ * DIM,
            transcendentals=SEQ * SEQ,
            bytes_accessed=4 * (SEQ * DIM + DIM * 3 * DIM + 3 * DIM
                                + SEQ * SEQ + SEQ * DIM),
        ),
    )(x, packed_w, packed_b, drop_scale)


def init_params(key):
    # Deterministic init mimicking nn.Linear default: U(-1/sqrt(in), 1/sqrt(in)).
    # Weights are PyTorch layout (out, in); biases (DIM,).
    bound = 1.0 / math.sqrt(DIM)
    ks = jax.random.split(key, 6)
    wq = jax.random.uniform(ks[0], (DIM, DIM), jnp.float32, -bound, bound)
    bq = jax.random.uniform(ks[1], (DIM,), jnp.float32, -bound, bound)
    wk = jax.random.uniform(ks[2], (DIM, DIM), jnp.float32, -bound, bound)
    bk = jax.random.uniform(ks[3], (DIM,), jnp.float32, -bound, bound)
    wv = jax.random.uniform(ks[4], (DIM, DIM), jnp.float32, -bound, bound)
    bv = jax.random.uniform(ks[5], (DIM,), jnp.float32, -bound, bound)
    return (wq, bq, wk, bk, wv, bv)


def pack_params(params):
    """Pre-transpose, fuse Q/K/V, and fold the attention scale into Q."""
    wq, bq, wk, bk, wv, bv = params
    scale = 1.0 / INV_SCALE          # == sqrt(8); z1.div(inv_scale) folded into Q
    # x @ W^T == x @ (W.T); fused weight is (DIM, 3*DIM)
    packed_w = jnp.concatenate([wq.T * scale, wk.T, wv.T], axis=1)
    packed_b = jnp.concatenate([bq * scale, bk, bv]).reshape(1, 3 * DIM)
    return packed_w.astype(jnp.float32), packed_b.astype(jnp.float32)


def make_dropout_scale(key, p=DROPOUT_P):
    # keep-mask with inverted scaling folded in: 0 or 1/(1-p)
    keep = jax.random.bernoulli(key, 1.0 - p, (SEQ, SEQ))
    return jnp.where(keep, jnp.float32(1.0 / (1.0 - p)), jnp.float32(0.0))


if __name__ == "__main__":
    root = jax.random.PRNGKey(0)
    k_x, k_p, k_d = jax.random.split(root, 3)
    x = jax.random.normal(k_x, (SEQ, DIM), dtype=jnp.float32)
    params = init_params(k_p)
    packed_w, packed_b = pack_params(params)
    drop_scale = make_dropout_scale(k_d)

    out = model_forward(x, packed_w, packed_b, drop_scale)
    out = jax.block_until_ready(out)
    assert out.shape == (SEQ, DIM) and out.dtype == jnp.float32
    assert bool(jnp.all(jnp.isfinite(out)))
    print("KERNEL_OK")
</pallas_src>

<mosaic_0001>
module attributes {stable_mosaic.version = 11 : i64} {
  func.func @attn_kernel(%arg0: memref<8x8xf32, #tpu.memory_space<vmem>>, %arg1: memref<8x24xf32, #tpu.memory_space<vmem>>, %arg2: memref<1x24xf32, #tpu.memory_space<vmem>>, %arg3: memref<8x8xf32, #tpu.memory_space<vmem>>, %arg4: memref<8x8xf32, #tpu.memory_space<vmem>>) attributes {dimension_semantics = [], scalar_prefetch = 0 : i64, scratch_operands = 0 : i64, tpu.core_type = #tpu.core_type<tc>} {
    %c0 = arith.constant 0 : index
    %c0_0 = arith.constant 0 : index
    %0 = vector.load %arg0[%c0, %c0_0] : memref<8x8xf32, #tpu.memory_space<vmem>>, vector<8x8xf32>
    %c0_1 = arith.constant 0 : index
    %c0_2 = arith.constant 0 : index
    %1 = vector.load %arg1[%c0_1, %c0_2] : memref<8x24xf32, #tpu.memory_space<vmem>>, vector<8x24xf32>
    %cst = arith.constant dense<0.000000e+00> : vector<8x24xf32>
    %2 = tpu.matmul %0, %1, %cst {dimension_numbers = #tpu.dot_dimension_numbers<[1], [0], [0], [1], [0, 0, 1, 1], [], []>} : vector<8x8xf32>, vector<8x24xf32>, vector<8x24xf32> -> vector<8x24xf32>
    %c0_3 = arith.constant 0 : index
    %c0_4 = arith.constant 0 : index
    %3 = vector.load %arg2[%c0_3, %c0_4] : memref<1x24xf32, #tpu.memory_space<vmem>>, vector<1x24xf32>
    %4 = vector.broadcast %3 : vector<1x24xf32> to vector<8x24xf32>
    %5 = arith.addf %2, %4 : vector<8x24xf32>
    %6 = vector.extract_strided_slice %5 {offsets = [0, 0], sizes = [8, 8], strides = [1, 1]} : vector<8x24xf32> to vector<8x8xf32>
    %7 = vector.extract_strided_slice %5 {offsets = [0, 8], sizes = [8, 8], strides = [1, 1]} : vector<8x24xf32> to vector<8x8xf32>
    %8 = vector.extract_strided_slice %5 {offsets = [0, 16], sizes = [8, 8], strides = [1, 1]} : vector<8x24xf32> to vector<8x8xf32>
    %cst_5 = arith.constant dense<0.000000e+00> : vector<8x8xf32>
    %9 = tpu.matmul %6, %7, %cst_5 {dimension_numbers = #tpu.dot_dimension_numbers<[1], [1], [0], [0], [0, 0, 1, 0], [], []>} : vector<8x8xf32>, vector<8x8xf32>, vector<8x8xf32> -> vector<8x8xf32>
    %cst_6 = arith.constant dense<0xFF800000> : vector<8xf32>
    %10 = vector.multi_reduction <maximumf>, %9, %cst_6 [1] : vector<8x8xf32> to vector<8xf32>
    %11 = vector.shape_cast %10 : vector<8xf32> to vector<8x1xf32>
    %12 = vector.broadcast %11 : vector<8x1xf32> to vector<8x8xf32>
    %13 = arith.subf %9, %12 : vector<8x8xf32>
    %14 = math.exp %13 : vector<8x8xf32>
    %cst_7 = arith.constant dense<0.000000e+00> : vector<8xf32>
    %15 = vector.multi_reduction <add>, %14, %cst_7 [1] : vector<8x8xf32> to vector<8xf32>
    %16 = vector.shape_cast %15 : vector<8xf32> to vector<8x1xf32>
    %17 = tpu.reciprocal %16 {approx = true} : vector<8x1xf32> -> vector<8x1xf32>
    %18 = vector.broadcast %17 : vector<8x1xf32> to vector<8x8xf32>
    %19 = arith.mulf %14, %18 : vector<8x8xf32>
    %c0_8 = arith.constant 0 : index
    %c0_9 = arith.constant 0 : index
    %20 = vector.load %arg3[%c0_8, %c0_9] : memref<8x8xf32, #tpu.memory_space<vmem>>, vector<8x8xf32>
    %21 = arith.mulf %19, %20 : vector<8x8xf32>
    %cst_10 = arith.constant dense<0.000000e+00> : vector<8x8xf32>
    %22 = tpu.matmul %21, %8, %cst_10 {dimension_numbers = #tpu.dot_dimension_numbers<[1], [0], [0], [1], [0, 0, 1, 1], [], []>} : vector<8x8xf32>, vector<8x8xf32>, vector<8x8xf32> -> vector<8x8xf32>
    %c0_11 = arith.constant 0 : index
    %c0_12 = arith.constant 0 : index
    %23 = vector.load %arg4[%c0_11, %c0_12] : memref<8x8xf32, #tpu.memory_space<vmem>>, vector<8x8xf32>
    tpu.vector_store %arg4[%c0_11, %c0_12], %22 {strides = array<i32>} : memref<8x8xf32, #tpu.memory_space<vmem>>, vector<8x8xf32>,
    return
  }
}

</mosaic_0001>

<llo_original>
// kernel: tpu_custom_call.1
$region0: #{tpu_custom_call.1}
  #allocation0 [shape = 'u32[]', space=smem, size = 0x4, offset = 0x4, fixed_abs, tag = 'smem constant byte address 0x4 - core index']
  #allocation1 [shape = 'u32[144,128]{1,0:T(1,128)}', space=vmem, size = 0x12000, scoped, tag = 'internal scratch']
  %s0 = inlined_call_operand.hbm [shape: f32[8,8], index: 0, kind: input, shape index: {}]
  %s1 = inlined_call_operand.hbm [shape: f32[8,24], index: 1, kind: input, shape index: {}]
  %s2 = inlined_call_operand.vmem [shape: f32[1,24], index: 2, kind: input, shape index: {}]
  %s3 = inlined_call_operand.vmem [shape: f32[8,8], index: 3, kind: input, shape index: {}]
  %s4 = inlined_call_operand.hbm [shape: f32[8,8], index: 4, kind: output, shape index: {}]
  %s5 = sld [smem:[#allocation0]]
  $region34: #{tpu_custom_call.1} parent=0
    _
  %s7 = ssub.s32 1, %s5
  %s8 = scalar_select 0, %s7, %s5
  $region1: #{tpu_custom_call.1} parent=0
    #allocation2 [shape = 'u8[4096]{0}', space=vmem, size = 0x1000, scoped, tag = 'input window, operand 0, single buffered']
    #allocation3 [shape = 's32[1]{0}', space=sflag, size = 0x4, scoped, tag = 'scoped memory for tpu_custom_call.1']
    #allocation4 [shape = 's32[1]{0}', space=sflag, size = 0x4, scoped, tag = 'scoped memory for tpu_custom_call.1']
    #allocation5 [shape = 'u8[4096]{0}', space=vmem, size = 0x1000, scoped, tag = 'input window, operand 1, single buffered']
    #allocation6 [shape = 's32[1]{0}', space=sflag, size = 0x4, scoped, tag = 'scoped memory for tpu_custom_call.1']
    #allocation7 [shape = 'u8[4096]{0}', space=vmem, size = 0x1000, scoped, tag = 'output window, operand 0, single buffered']
    %9 = vsyncpa [#allocation3], 0
    %10 = vsyncpa [#allocation6], 0
    %11 = vsyncpa [#allocation4], 0
    // Predicated region
    $region2: #{tpu_custom_call.1} parent=1 // pred_check
      _
    $region3: #{tpu_custom_call.1} parent=1 // pred_check_branch
      %13 = sbr.rel (0) target = $region5
    $region4: #{tpu_custom_call.1} parent=1 // pred_region
      %s15 = ssub.s32 128, 128
      %16 = vsyncadd [#allocation3], %s15
      %s18 = sshll.u32 [#allocation2], 4
      %s19 = int_to_ptr.vmem [resolvable:$true] %s18
      %21 = dma.hbm_to_vmem [thread:$0]  %s0, 128, %s19, [#allocation3]
    $region5: #{tpu_custom_call.1} parent=1 // pred_fallthru
      _
    // Predicated region
    $region6: #{tpu_custom_call.1} parent=1 // pred_check
      _
    $region7: #{tpu_custom_call.1} parent=1 // pred_check_branch
      %23 = sbr.rel (0) target = $region9
    $region8: #{tpu_custom_call.1} parent=1 // pred_region
      %s25 = ssub.s32 128, 128
      %26 = vsyncadd [#allocation6], %s25
      %s28 = sshll.u32 [#allocation5], 4
      %s29 = int_to_ptr.vmem [resolvable:$true] %s28
      %31 = dma.hbm_to_vmem [thread:$0]  %s1, 128, %s29, [#allocation6]
    $region9: #{tpu_custom_call.1} parent=1 // pred_fallthru
      _
    // Predicated region
    $region10: #{tpu_custom_call.1} parent=1 // pred_check
      _
    $region11: #{tpu_custom_call.1} parent=1 // pred_check_branch
      %33 = sbr.rel (0) target = $region13
    $region12: #{tpu_custom_call.1} parent=1 // pred_region
      _
    $region13: #{tpu_custom_call.1} parent=1 // pred_fallthru
      _
    // Predicated region
    $region14: #{tpu_custom_call.1} parent=1 // pred_check
      _
    $region15: #{tpu_custom_call.1} parent=1 // pred_check_branch
      %35 = sbr.rel (0) target = $region17
    $region16: #{tpu_custom_call.1} parent=1 // pred_region
      _
    $region17: #{tpu_custom_call.1} parent=1 // pred_fallthru
      _
    // Predicated region
    $region18: #{tpu_custom_call.1} parent=1 // pred_check
      _
    $region19: #{tpu_custom_call.1} parent=1 // pred_check_branch
      %37 = sbr.rel (0) target = $region21
    $region20: #{tpu_custom_call.1} parent=1 // pred_region
      %38 = dma.done [#allocation3], 128
    $region21: #{tpu_custom_call.1} parent=1 // pred_fallthru
      _
    // Predicated region
    $region22: #{tpu_custom_call.1} parent=1 // pred_check
      _
    $region23: #{tpu_custom_call.1} parent=1 // pred_check_branch
      %40 = sbr.rel (0) target = $region25
    $region24: #{tpu_custom_call.1} parent=1 // pred_region
      %41 = dma.done [#allocation6], 128
    $region25: #{tpu_custom_call.1} parent=1 // pred_fallthru
      _
    %v42 = vld [vmem:[#allocation2] sm:$0xff]
    %v43 = vld [vmem:[#allocation5] sm:$0xff]
    %v44 = vld [vmem:[%s2] sm:$0x1]
    %v46 = vlaneseq
    %v47 = vshrl.u32 %v46, 7
    %v48 = vsub.s32 0, %v47
    %v49 = vrot.slane %v44, %v48
    %vm51 = vcmask 64512
    %v53 = vsel %vm51, %v42, 0
    %55 = vmatprep.subr.mxu0 0.0
    %56 = vmatpush1.msra.mxu0 %v43
    %57 = vmatprep.subr.mxu0 0.0
    %58 = vmatpush1.msra.mxu0 0.0
    %59 = vmatprep.subr.mxu0 0.0
    %60 = vmatpush1.msra.mxu0 0.0
    %61 = vmatprep.subr.mxu0 0.0
    %62 = vmatpush1.msra.mxu0 0.0
    %63 = vmatprep.subr.mxu0 0.0
    %64 = vmatpush1.msra.mxu0 0.0
    %65 = vmatprep.subr.mxu0 0.0
    %66 = vmatpush1.msra.mxu0 0.0
    %67 = vmatprep.subr.mxu0 0.0
    %68 = vmatpush1.msra.mxu0 0.0
    %69 = vmatprep.subr.mxu0 0.0
    %70 = vmatpush1.msra.mxu0 0.0
    %71 = vmatprep.subr.mxu0 0.0
    %72 = vmatpush1.msra.mxu0 0.0
    %73 = vmatprep.subr.mxu0 0.0
    %74 = vmatpush1.msra.mxu0 0.0
    %75 = vmatprep.subr.mxu0 0.0
    %76 = vmatpush1.msra.mxu0 0.0
    %77 = vmatprep.subr.mxu0 0.0
    %78 = vmatpush1.msra.mxu0 0.0
    %79 = vmatprep.subr.mxu0 0.0
    %80 = vmatpush1.msra.mxu0 0.0
    %81 = vmatprep.subr.mxu0 0.0
    %82 = vmatpush1.msra.mxu0 0.0
    %83 = vmatprep.subr.mxu0 0.0
    %84 = vmatpush1.msra.mxu0 0.0
    %85 = vmatprep.subr.mxu0 0.0
    %86 = vmatpush1.msra.mxu0 0.0
    %87 = vmatprep.subr.mxu0 0.0
    %88 = vmatpush1.msra.mxu0 0.0
    %89 = vmatprep.subr.mxu0 0.0
    %90 = vmatpush1.msra.mxu0 0.0
    %91 = vmatprep.subr.mxu0 0.0
    %92 = vmatpush1.msra.mxu0 0.0
    %93 = vmatprep.subr.mxu0 0.0
    %94 = vmatpush1.msra.mxu0 0.0
    %95 = vmatprep.subr.mxu0 0.0
    %96 = vmatpush1.msra.mxu0 0.0
    %97 = vmatprep.subr.mxu0 0.0
    %98 = vmatpush1.msra.mxu0 0.0
    %99 = vmatprep.subr.mxu0 0.0
    %100 = vmatpush1.msra.mxu0 0.0
    %101 = vmatprep.subr.mxu0 0.0
    %102 = vmatpush1.msra.mxu0 0.0
    %103 = vmatprep.subr.mxu0 0.0
    %104 = vmatpush1.msra.mxu0 0.0
    %105 = vmatprep.subr.mxu0 0.0
    %106 = vmatpush1.msra.mxu0 0.0
    %107 = vmatprep.subr.mxu0 0.0
    %108 = vmatpush1.msra.mxu0 0.0
    %109 = vmatprep.subr.mxu0 0.0
    %110 = vmatpush1.msra.mxu0 0.0
    %111 = vmatprep.subr.mxu0 0.0
    %112 = vmatpush1.msra.mxu0 0.0
    %113 = vmatprep.subr.mxu0 0.0
    %114 = vmatpush1.msra.mxu0 0.0
    %115 = vmatprep.subr.mxu0 0.0
    %116 = vmatpush1.msra.mxu0 0.0
    %117 = vmatprep.subr.mxu0 0.0
    %118 = vmatpush1.msra.mxu0 0.0
    %119 = vmatprep.mubr.f32.mxu0 0.0
    %120 = vmatmul.mubr.f32.gmra.mrb[0].mxu0 %v53
    %v121 = vpop.f32.mrb[0].mxu0
    %v122 = vadd.f32 %v49, %v121
    %v123 = vpop.f32.mrb[0].mxu0
    %124 = vdwg.mxu0
    %126 = vrot.lane.b32.xlu0 %v122, 120
    %v127 = vpop.permute.xlu0 %126
    %v128 = vsel %vm51, %v122, 0
    %v130 = vsel %vm51, %v127, 0
    %132 = vmatprep.subr.mxu0 0.0
    %133 = vmatpush1.xpose.msra.mxu0 %v130
    %134 = vmatprep.subr.mxu0 0.0
    %135 = vmatpush1.xpose.msra.mxu0 0.0
    %136 = vmatprep.subr.mxu0 0.0
    %137 = vmatpush1.xpose.msra.mxu0 0.0
    %138 = vmatprep.subr.mxu0 0.0
    %139 = vmatpush1.xpose.msra.mxu0 0.0
    %140 = vmatprep.subr.mxu0 0.0
    %141 = vmatpush1.xpose.msra.mxu0 0.0
    %142 = vmatprep.subr.mxu0 0.0
    %143 = vmatpush1.xpose.msra.mxu0 0.0
    %144 = vmatprep.subr.mxu0 0.0
    %145 = vmatpush1.xpose.msra.mxu0 0.0
    %146 = vmatprep.subr.mxu0 0.0
    %147 = vmatpush1.xpose.msra.mxu0 0.0
    %148 = vmatprep.subr.mxu0 0.0
    %149 = vmatpush1.xpose.msra.mxu0 0.0
    %150 = vmatprep.subr.mxu0 0.0
    %151 = vmatpush1.xpose.msra.mxu0 0.0
    %152 = vmatprep.subr.mxu0 0.0
    %153 = vmatpush1.xpose.msra.mxu0 0.0
    %154 = vmatprep.subr.mxu0 0.0
    %155 = vmatpush1.xpose.msra.mxu0 0.0
    %156 = vmatprep.subr.mxu0 0.0
    %157 = vmatpush1.xpose.msra.mxu0 0.0
    %158 = vmatprep.subr.mxu0 0.0
    %159 = vmatpush1.xpose.msra.mxu0 0.0
    %160 = vmatprep.subr.mxu0 0.0
    %161 = vmatpush1.xpose.msra.mxu0 0.0
    %162 = vmatprep.subr.mxu0 0.0
    %163 = vmatpush1.xpose.msra.mxu0 0.0
    %164 = vmatprep.subr.mxu0 0.0
    %165 = vmatpush1.xpose.msra.mxu0 0.0
    %166 = vmatprep.subr.mxu0 0.0
    %167 = vmatpush1.xpose.msra.mxu0 0.0
    %168 = vmatprep.subr.mxu0 0.0
    %169 = vmatpush1.xpose.msra.mxu0 0.0
    %170 = vmatprep.subr.mxu0 0.0
    %171 = vmatpush1.xpose.msra.mxu0 0.0
    %172 = vmatprep.subr.mxu0 0.0
    %173 = vmatpush1.xpose.msra.mxu0 0.0
    %174 = vmatprep.subr.mxu0 0.0
    %175 = vmatpush1.xpose.msra.mxu0 0.0
    %176 = vmatprep.subr.mxu0 0.0
    %177 = vmatpush1.xpose.msra.mxu0 0.0
    %178 = vmatprep.subr.mxu0 0.0
    %179 = vmatpush1.xpose.msra.mxu0 0.0
    %180 = vmatprep.subr.mxu0 0.0
    %181 = vmatpush1.xpose.msra.mxu0 0.0
    %182 = vmatprep.subr.mxu0 0.0
    %183 = vmatpush1.xpose.msra.mxu0 0.0
    %184 = vmatprep.subr.mxu0 0.0
    %185 = vmatpush1.xpose.msra.mxu0 0.0
    %186 = vmatprep.subr.mxu0 0.0
    %187 = vmatpush1.xpose.msra.mxu0 0.0
    %188 = vmatprep.subr.mxu0 0.0
    %189 = vmatpush1.xpose.msra.mxu0 0.0
    %190 = vmatprep.subr.mxu0 0.0
    %191 = vmatpush1.xpose.msra.mxu0 0.0
    %192 = vmatprep.subr.mxu0 0.0
    %193 = vmatpush1.xpose.msra.mxu0 0.0
    %194 = vmatprep.subr.mxu0 0.0
    %195 = vmatpush1.xpose.msra.mxu0 0.0
    %196 = vmatprep.mubr.f32.mxu0 0.0
    %197 = vmatmul.mubr.f32.gmra.mrb[0].mxu0 %v128
    %v198 = vpop.f32.mrb[0].mxu0
    %v199 = vadd.f32 0.0, %v198
    %v200 = vpop.f32.mrb[0].mxu0
    %201 = vdwg.mxu0
    %v202 = vsel %vm51, %v199, -inf
    %203 = vmax.xlane.f32.xlu0 %v202
    %v204 = vpop.xlane.xlu0 %203
    %v205 = vsub.f32 %v199, %v204
    %v206 = vmul.f32 %v205, 1.442695
    %v207 = vpow.pop %v206
    %v208 = vsel %vm51, %v207, 0.0
    %209 = vadd.xlane.f32.xlu0 %v208
    %v210 = vpop.xlane.xlu0 %209
    %v211 = vrcp.pop %v210
    %v212 = vmul.f32 %v207, %v211
    %v213 = vld [vmem:[%s3] sm:$0xff]
    %v214 = vmul.f32 %v212, %v213
    %215 = vrot.lane.b32.xlu0 %v122, 112
    %v216 = vpop.permute.xlu0 %215
    %v219 = vsel %vm51, %v214, 0
    %221 = vmatprep.subr.mxu0 0.0
    %222 = vmatpush1.msra.mxu0 %v216
    %223 = vmatprep.subr.mxu0 0.0
    %224 = vmatpush1.msra.mxu0 0.0
    %225 = vmatprep.subr.mxu0 0.0
    %226 = vmatpush1.msra.mxu0 0.0
    %227 = vmatprep.subr.mxu0 0.0
    %228 = vmatpush1.msra.mxu0 0.0
    %229 = vmatprep.subr.mxu0 0.0
    %230 = vmatpush1.msra.mxu0 0.0
    %231 = vmatprep.subr.mxu0 0.0
    %232 = vmatpush1.msra.mxu0 0.0
    %233 = vmatprep.subr.mxu0 0.0
    %234 = vmatpush1.msra.mxu0 0.0
    %235 = vmatprep.subr.mxu0 0.0
    %236 = vmatpush1.msra.mxu0 0.0
    %237 = vmatprep.subr.mxu0 0.0
    %238 = vmatpush1.msra.mxu0 0.0
    %239 = vmatprep.subr.mxu0 0.0
    %240 = vmatpush1.msra.mxu0 0.0
    %241 = vmatprep.subr.mxu0 0.0
    %242 = vmatpush1.msra.mxu0 0.0
    %243 = vmatprep.subr.mxu0 0.0
    %244 = vmatpush1.msra.mxu0 0.0
    %245 = vmatprep.subr.mxu0 0.0
    %246 = vmatpush1.msra.mxu0 0.0
    %247 = vmatprep.subr.mxu0 0.0
    %248 = vmatpush1.msra.mxu0 0.0
    %249 = vmatprep.subr.mxu0 0.0
    %250 = vmatpush1.msra.mxu0 0.0
    %251 = vmatprep.subr.mxu0 0.0
    %252 = vmatpush1.msra.mxu0 0.0
    %253 = vmatprep.subr.mxu0 0.0
    %254 = vmatpush1.msra.mxu0 0.0
    %255 = vmatprep.subr.mxu0 0.0
    %256 = vmatpush1.msra.mxu0 0.0
    %257 = vmatprep.subr.mxu0 0.0
    %258 = vmatpush1.msra.mxu0 0.0
    %259 = vmatprep.subr.mxu0 0.0
    %260 = vmatpush1.msra.mxu0 0.0
    %261 = vmatprep.subr.mxu0 0.0
    %262 = vmatpush1.msra.mxu0 0.0
    %263 = vmatprep.subr.mxu0 0.0
    %264 = vmatpush1.msra.mxu0 0.0
    %265 = vmatprep.subr.mxu0 0.0
    %266 = vmatpush1.msra.mxu0 0.0
    %267 = vmatprep.subr.mxu0 0.0
    %268 = vmatpush1.msra.mxu0 0.0
    %269 = vmatprep.subr.mxu0 0.0
    %270 = vmatpush1.msra.mxu0 0.0
    %271 = vmatprep.subr.mxu0 0.0
    %272 = vmatpush1.msra.mxu0 0.0
    %273 = vmatprep.subr.mxu0 0.0
    %274 = vmatpush1.msra.mxu0 0.0
    %275 = vmatprep.subr.mxu0 0.0
    %276 = vmatpush1.msra.mxu0 0.0
    %277 = vmatprep.subr.mxu0 0.0
    %278 = vmatpush1.msra.mxu0 0.0
    %279 = vmatprep.subr.mxu0 0.0
    %280 = vmatpush1.msra.mxu0 0.0
    %281 = vmatprep.subr.mxu0 0.0
    %282 = vmatpush1.msra.mxu0 0.0
    %283 = vmatprep.subr.mxu0 0.0
    %284 = vmatpush1.msra.mxu0 0.0
    %285 = vmatprep.mubr.f32.mxu0 0.0
    %286 = vmatmul.mubr.f32.gmra.mrb[0].mxu0 %v219
    %v287 = vpop.f32.mrb[0].mxu0
    %v288 = vadd.f32 0.0, %v287
    %v289 = vpop.f32.mrb[0].mxu0
    %290 = vdwg.mxu0
    %291 = vst.msk [vmem:[#allocation7] sm:$0xff] %vm51, %v288
    // Predicated region
    $region26: #{tpu_custom_call.1} parent=1 // pred_check
      _
    $region27: #{tpu_custom_call.1} parent=1 // pred_check_branch
      %293 = sbr.rel (0) target = $region29
    $region28: #{tpu_custom_call.1} parent=1 // pred_region
      %s295 = ssub.s32 128, 128
      %296 = vsyncadd [#allocation4], %s295
      %s298 = sshll.u32 [#allocation7], 4
      %s299 = int_to_ptr.vmem [resolvable:$true] %s298
      %301 = dma.vmem_to_hbm [thread:$0]  %s299, 128, %s4, [#allocation4]
    $region29: #{tpu_custom_call.1} parent=1 // pred_fallthru
      _
    // Predicated region
    $region30: #{tpu_custom_call.1} parent=1 // pred_check
      _
    $region31: #{tpu_custom_call.1} parent=1 // pred_check_branch
      %303 = sbr.rel (0) target = $region33
    $region32: #{tpu_custom_call.1} parent=1 // pred_region
      %304 = dma.done [#allocation4], 128
    $region33: #{tpu_custom_call.1} parent=1 // pred_fallthru
      _
    %305 = vsyncpa [#allocation3], 1
    %306 = vsyncpa [#allocation6], 1
    %307 = vsyncpa [#allocation4], 1

</llo_original>
